<compile_context>
chip_gen: v6e
topology: v6e:2x2x1
jax: 0.10.0
libtpu: 0.0.40
codegen_flags: <defaults>
</compile_context>

<pallas_src>
import functools

import jax
import jax.numpy as jnp
from jax.experimental import pallas as pl
from jax.experimental.pallas import tpu as pltpu

D_IN = 32       # stand-in for X_train.shape[1]
H1 = 256
H2 = 64
D_OUT = 1
BN_EPS = 1e-5
W3_PAD_ROWS = 16   # pad the single fc3 output row to a native bf16 sublane tile


def net_kernel(x_ref, w1_ref, b1_ref, w2_ref, b2_ref, w3_ref, b3_ref, o_ref):
    # In-kernel cast of the input block to bf16 (MXU operand); f32 accumulation.
    x = x_ref[...].astype(jnp.bfloat16)                              # (tb, D_IN)

    # fc1 with BatchNorm1d folded into (w1', b1'), then ReLU (f32 VPU, v5e-safe),
    # result cast to bf16 fused with the ReLU output for the next MXU operand.
    h1 = jnp.dot(x, w1_ref[...], preferred_element_type=jnp.float32)
    h1 = jnp.maximum(h1 + b1_ref[...], 0.0).astype(jnp.bfloat16)     # (tb, H1)

    # fc2 + Dropout(0.2) (eval mode => identity) + ReLU.
    # TODO(synk): training-mode dropout (random mask + 1/(1-p) scale) not implemented.
    h2 = jnp.dot(h1, w2_ref[...], preferred_element_type=jnp.float32)
    h2 = jnp.maximum(h2 + b2_ref[...], 0.0).astype(jnp.bfloat16)     # (tb, H2)

    # fc3 + sigmoid, computed as w3 @ h2^T so the D_OUT=1 result is produced
    # lane-dense as a (1, tb) row (transposed-RHS dot_general; rows 1..15 of w3
    # are zero padding and are sliced away before the sigmoid).
    h3 = jax.lax.dot_general(
        w3_ref[...], h2,
        dimension_numbers=(((1,), (1,)), ((), ())),
        preferred_element_type=jnp.float32)                          # (16, tb)
    o_ref[...] = jax.nn.sigmoid(h3[0:1, :] + b3_ref[...])            # (1, tb)


@functools.partial(jax.jit, static_argnames=("tb",))
def net_forward(x, params, *, tb=None):
    B, D = x.shape
    assert D == D_IN
    tb = B if tb is None else min(tb, B)
    assert B % tb == 0, "batch must be a multiple of the batch tile"
    assert tb == B or tb % 128 == 0, "partial batch tiles must be multiples of 128"
    w1, b1, w2, b2, w3, b3 = params

    const = lambda shape: pl.BlockSpec(shape, lambda i: (0, 0))
    grid_spec = pltpu.PrefetchScalarGridSpec(
        num_scalar_prefetch=0,
        grid=(B // tb,),
        in_specs=[
            pl.BlockSpec((tb, D_IN), lambda i: (i, 0)),   # x           (f32, cast in-kernel)
            const((D_IN, H1)),                            # w1 (folded) (bf16)
            const((1, H1)),                               # b1 (folded) (f32)
            const((H1, H2)),                              # w2          (bf16)
            const((1, H2)),                               # b2          (f32)
            const((W3_PAD_ROWS, H2)),                     # w3 rows     (bf16)
            const((1, 1)),                                # b3          (f32)
        ],
        # Lane-dense output: one (1, tb) row per grid step into a (1, B) slab.
        out_specs=pl.BlockSpec((1, tb), lambda i: (0, i)),
    )
    out = pl.pallas_call(
        net_kernel,
        out_shape=jax.ShapeDtypeStruct((1, B), jnp.float32),
        grid_spec=grid_spec,
        compiler_params=pltpu.CompilerParams(
            dimension_semantics=("arbitrary",)),
    )(x, w1, b1, w2, b2, w3, b3)
    return out.reshape(B, D_OUT)


def init_params(key):
    ks = jax.random.split(key, 8)
    # Linear weights stored (in, out); biases as (1, out) rows for VMEM.
    w1 = jax.random.normal(ks[0], (D_IN, H1), jnp.float32) * 0.05
    b1 = jax.random.normal(ks[1], (1, H1), jnp.float32) * 0.01
    w2 = jax.random.normal(ks[2], (H1, H2), jnp.float32) * 0.05
    b2 = jax.random.normal(ks[3], (1, H2), jnp.float32) * 0.01
    w3 = jax.random.normal(ks[4], (H2, D_OUT), jnp.float32) * 0.05
    b3 = jax.random.normal(ks[5], (1, D_OUT), jnp.float32) * 0.01
    # BatchNorm1d params + running stats (inference semantics), folded into fc1
    # in f32:  y = gamma*(z-mean)/sqrt(var+eps)+beta, z = x@w1+b1
    #   => w1' = w1*scale (column-wise), b1' = b1*scale + (beta - mean*scale)
    gamma = 1.0 + 0.1 * jax.random.normal(ks[6], (1, H1), jnp.float32)
    beta = 0.1 * jax.random.normal(ks[7], (1, H1), jnp.float32)
    running_mean = jnp.zeros((1, H1), jnp.float32)
    running_var = jnp.ones((1, H1), jnp.float32)
    bn_scale = gamma / jnp.sqrt(running_var + BN_EPS)
    bn_bias = beta - running_mean * bn_scale
    w1_folded = w1 * bn_scale
    b1_folded = b1 * bn_scale + bn_bias
    # fc3 weight stored as rows (out, in), zero-padded to 16 sublanes
    # (native bf16 sublane tile).  Rows 1..15 MUST stay zero (sliced away in-kernel).
    w3_rows = jnp.zeros((W3_PAD_ROWS, H2), jnp.float32).at[0, :].set(w3[:, 0])
    return (
        w1_folded.astype(jnp.bfloat16),
        b1_folded,                        # f32
        w2.astype(jnp.bfloat16),
        b2,                               # f32
        w3_rows.astype(jnp.bfloat16),
        b3.reshape(1, 1),                 # f32
    )


def reference_forward(x, params):
    # Pure-JAX reference using the same (bf16-rounded) operands, f32 math.
    w1, b1, w2, b2, w3_rows, b3 = params
    xf = x.astype(jnp.bfloat16).astype(jnp.float32)
    h1 = jnp.maximum(xf @ w1.astype(jnp.float32) + b1, 0.0)
    h1 = h1.astype(jnp.bfloat16).astype(jnp.float32)
    h2 = jnp.maximum(h1 @ w2.astype(jnp.float32) + b2, 0.0)
    h2 = h2.astype(jnp.bfloat16).astype(jnp.float32)
    h3 = h2 @ w3_rows.astype(jnp.float32)[0:1, :].T + b3
    return jax.nn.sigmoid(h3)


if __name__ == "__main__":
    key = jax.random.PRNGKey(0)
    kx, kp = jax.random.split(key)
    B = 256          # small deterministic example batch; single grid step (tb == B)
    x = jax.random.normal(kx, (B, D_IN), jnp.float32)
    params = init_params(kp)

    out = net_forward(x, params)
    out = jax.block_until_ready(out)

    ref = reference_forward(x, params)
    assert out.shape == (B, D_OUT)
    # bf16 matmul operands (f32 accumulation) => loosened tolerance vs f32 ref.
    assert jnp.allclose(out, ref, atol=2e-2, rtol=2e-2), float(
        jnp.max(jnp.abs(out - ref)))
    print("KERNEL_OK")
</pallas_src>

<mosaic_0001>
module attributes {stable_mosaic.version = 11 : i64} {
  func.func @net_kernel(%arg0: i32, %arg1: memref<256x32xf32, #tpu.memory_space<vmem>>, %arg2: memref<32x256xbf16, #tpu.memory_space<vmem>>, %arg3: memref<1x256xf32, #tpu.memory_space<vmem>>, %arg4: memref<256x64xbf16, #tpu.memory_space<vmem>>, %arg5: memref<1x64xf32, #tpu.memory_space<vmem>>, %arg6: memref<16x64xbf16, #tpu.memory_space<vmem>>, %arg7: memref<1x1xf32, #tpu.memory_space<vmem>>, %arg8: memref<1x256xf32, #tpu.memory_space<vmem>>) attributes {dimension_semantics = [#tpu.dimension_semantics<arbitrary>], iteration_bounds = array<i64: 1>, scalar_prefetch = 0 : i64, scratch_operands = 0 : i64, tpu.core_type = #tpu.core_type<tc>, window_params = [{transform_indices = @transform_0, window_bounds = array<i64: 256, 32>}, {pipeline_mode = #tpu.pipeline_mode<synchronous>, transform_indices = @transform_1, window_bounds = array<i64: 32, 256>}, {pipeline_mode = #tpu.pipeline_mode<synchronous>, transform_indices = @transform_2, window_bounds = array<i64: 1, 256>}, {pipeline_mode = #tpu.pipeline_mode<synchronous>, transform_indices = @transform_3, window_bounds = array<i64: 256, 64>}, {pipeline_mode = #tpu.pipeline_mode<synchronous>, transform_indices = @transform_4, window_bounds = array<i64: 1, 64>}, {pipeline_mode = #tpu.pipeline_mode<synchronous>, transform_indices = @transform_5, window_bounds = array<i64: 16, 64>}, {pipeline_mode = #tpu.pipeline_mode<synchronous>, transform_indices = @transform_6, window_bounds = array<i64: 1, 1>}, {transform_indices = @transform_7, window_bounds = array<i64: 1, 256>}]} {
    %c0 = arith.constant 0 : index
    %c0_0 = arith.constant 0 : index
    %0 = vector.load %arg1[%c0, %c0_0] : memref<256x32xf32, #tpu.memory_space<vmem>>, vector<256x32xf32>
    %1 = arith.truncf %0 : vector<256x32xf32> to vector<256x32xbf16>
    %c0_1 = arith.constant 0 : index
    %c0_2 = arith.constant 0 : index
    %2 = vector.load %arg2[%c0_1, %c0_2] : memref<32x256xbf16, #tpu.memory_space<vmem>>, vector<32x256xbf16>
    %cst = arith.constant dense<0.000000e+00> : vector<256x256xf32>
    %3 = tpu.matmul %1, %2, %cst {dimension_numbers = #tpu.dot_dimension_numbers<[1], [0], [0], [1], [0, 0, 1, 1], [], []>} : vector<256x32xbf16>, vector<32x256xbf16>, vector<256x256xf32> -> vector<256x256xf32>
    %c0_3 = arith.constant 0 : index
    %c0_4 = arith.constant 0 : index
    %4 = vector.load %arg3[%c0_3, %c0_4] : memref<1x256xf32, #tpu.memory_space<vmem>>, vector<1x256xf32>
    %5 = vector.broadcast %4 : vector<1x256xf32> to vector<256x256xf32>
    %6 = arith.addf %3, %5 : vector<256x256xf32>
    %cst_5 = arith.constant 0.000000e+00 : f32
    %7 = vector.broadcast %cst_5 : f32 to vector<256x256xf32>
    %8 = arith.maximumf %6, %7 : vector<256x256xf32>
    %9 = arith.truncf %8 : vector<256x256xf32> to vector<256x256xbf16>
    %c0_6 = arith.constant 0 : index
    %c0_7 = arith.constant 0 : index
    %10 = vector.load %arg4[%c0_6, %c0_7] : memref<256x64xbf16, #tpu.memory_space<vmem>>, vector<256x64xbf16>
    %cst_8 = arith.constant dense<0.000000e+00> : vector<256x64xf32>
    %11 = tpu.matmul %9, %10, %cst_8 {dimension_numbers = #tpu.dot_dimension_numbers<[1], [0], [0], [1], [0, 0, 1, 1], [], []>} : vector<256x256xbf16>, vector<256x64xbf16>, vector<256x64xf32> -> vector<256x64xf32>
    %c0_9 = arith.constant 0 : index
    %c0_10 = arith.constant 0 : index
    %12 = vector.load %arg5[%c0_9, %c0_10] : memref<1x64xf32, #tpu.memory_space<vmem>>, vector<1x64xf32>
    %13 = vector.broadcast %12 : vector<1x64xf32> to vector<256x64xf32>
    %14 = arith.addf %11, %13 : vector<256x64xf32>
    %cst_11 = arith.constant 0.000000e+00 : f32
    %15 = vector.broadcast %cst_11 : f32 to vector<256x64xf32>
    %16 = arith.maximumf %14, %15 : vector<256x64xf32>
    %17 = arith.truncf %16 : vector<256x64xf32> to vector<256x64xbf16>
    %c0_12 = arith.constant 0 : index
    %c0_13 = arith.constant 0 : index
    %18 = vector.load %arg6[%c0_12, %c0_13] : memref<16x64xbf16, #tpu.memory_space<vmem>>, vector<16x64xbf16>
    %cst_14 = arith.constant dense<0.000000e+00> : vector<16x256xf32>
    %19 = tpu.matmul %18, %17, %cst_14 {dimension_numbers = #tpu.dot_dimension_numbers<[1], [1], [0], [0], [0, 0, 1, 0], [], []>} : vector<16x64xbf16>, vector<256x64xbf16>, vector<16x256xf32> -> vector<16x256xf32>
    %20 = vector.extract_strided_slice %19 {offsets = [0, 0], sizes = [1, 256], strides = [1, 1]} : vector<16x256xf32> to vector<1x256xf32>
    %c0_15 = arith.constant 0 : index
    %c0_16 = arith.constant 0 : index
    %21 = vector.load %arg7[%c0_15, %c0_16] : memref<1x1xf32, #tpu.memory_space<vmem>>, vector<1x1xf32>
    %22 = vector.broadcast %21 : vector<1x1xf32> to vector<1x256xf32>
    %23 = arith.addf %20, %22 : vector<1x256xf32>
    %24 = arith.negf %23 : vector<1x256xf32>
    %25 = math.exp %24 : vector<1x256xf32>
    %cst_17 = arith.constant 1.000000e+00 : f32
    %26 = vector.broadcast %cst_17 : f32 to vector<1x256xf32>
    %27 = arith.addf %26, %25 : vector<1x256xf32>
    %28 = arith.divf %26, %27 : vector<1x256xf32>
    %c0_18 = arith.constant 0 : index
    %c0_19 = arith.constant 0 : index
    %29 = vector.load %arg8[%c0_18, %c0_19] : memref<1x256xf32, #tpu.memory_space<vmem>>, vector<1x256xf32>
    tpu.vector_store %arg8[%c0_18, %c0_19], %28 {strides = array<i32>} : memref<1x256xf32, #tpu.memory_space<vmem>>, vector<1x256xf32>,
    return
  }
  func.func @transform_0(%arg0: i32) -> (i32, i32) {
    %c0_i32 = arith.constant 0 : i32
    %c0_i32_0 = arith.constant 0 : i32
    return %arg0, %c0_i32 : i32, i32
  }
  func.func @transform_1(%arg0: i32) -> (i32, i32) {
    %c0_i32 = arith.constant 0 : i32
    %c0_i32_0 = arith.constant 0 : i32
    %c0_i32_1 = arith.constant 0 : i32
    return %c0_i32, %c0_i32_0 : i32, i32
  }
  func.func @transform_2(%arg0: i32) -> (i32, i32) {
    %c0_i32 = arith.constant 0 : i32
    %c0_i32_0 = arith.constant 0 : i32
    %c0_i32_1 = arith.constant 0 : i32
    return %c0_i32, %c0_i32_0 : i32, i32
  }
  func.func @transform_3(%arg0: i32) -> (i32, i32) {
    %c0_i32 = arith.constant 0 : i32
    %c0_i32_0 = arith.constant 0 : i32
    %c0_i32_1 = arith.constant 0 : i32
    return %c0_i32, %c0_i32_0 : i32, i32
  }
  func.func @transform_4(%arg0: i32) -> (i32, i32) {
    %c0_i32 = arith.constant 0 : i32
    %c0_i32_0 = arith.constant 0 : i32
    %c0_i32_1 = arith.constant 0 : i32
    return %c0_i32, %c0_i32_0 : i32, i32
  }
  func.func @transform_5(%arg0: i32) -> (i32, i32) {
    %c0_i32 = arith.constant 0 : i32
    %c0_i32_0 = arith.constant 0 : i32
    %c0_i32_1 = arith.constant 0 : i32
    return %c0_i32, %c0_i32_0 : i32, i32
  }
  func.func @transform_6(%arg0: i32) -> (i32, i32) {
    %c0_i32 = arith.constant 0 : i32
    %c0_i32_0 = arith.constant 0 : i32
    %c0_i32_1 = arith.constant 0 : i32
    return %c0_i32, %c0_i32_0 : i32, i32
  }
  func.func @transform_7(%arg0: i32) -> (i32, i32) {
    %c0_i32 = arith.constant 0 : i32
    %c0_i32_0 = arith.constant 0 : i32
    return %c0_i32, %arg0 : i32, i32
  }
}

</mosaic_0001>

<llo_original>
// kernel: net_forward.1
$region0: #{net_forward.1}
  #allocation0 [shape = 'u32[]', space=smem, size = 0x4, offset = 0x4, fixed_abs, tag = 'smem constant byte address 0x4 - core index']
  #allocation1 [shape = 'u32[144,128]{1,0:T(1,128)}', space=vmem, size = 0x12000, scoped, tag = 'internal scratch']
  #allocation2 [shape = 'f32[1,1]{1,0:T(1,128)S(1)}', space=vmem, size = 0x200, scoped, tag = 'scoped memory for net_forward.1']
  %s0 = inlined_call_operand.vmem [shape: f32[256,32], index: 0, kind: input, shape index: {}]
  %s1 = inlined_call_operand.vmem [shape: bf16[32,256], index: 1, kind: input, shape index: {}]
  %s2 = inlined_call_operand.vmem [shape: f32[1,256], index: 2, kind: input, shape index: {}]
  %s3 = inlined_call_operand.vmem [shape: bf16[256,64], index: 3, kind: input, shape index: {}]
  %s4 = inlined_call_operand.vmem [shape: f32[1,64], index: 4, kind: input, shape index: {}]
  %s5 = inlined_call_operand.vmem [shape: bf16[16,64], index: 5, kind: input, shape index: {}]
  %s6 = inlined_call_operand.<no memory space> [shape: f32[1,1], index: 6, kind: input, shape index: {}]
  %s7 = inlined_call_operand.hbm [shape: f32[1,256], index: 7, kind: output, shape index: {}]
  %s8 = sld [smem:[#allocation0]]
  $region38: #{net_forward.1} parent=0
    _
  %s10 = ssub.s32 1, %s8
  %s11 = scalar_select 0, %s10, %s8
  %v12 = vstv %s6
  %13 = vst [vmem:[#allocation2] sm:$0x1] %v12
  $region1: #{net_forward.1} parent=0
    #allocation3 [shape = 'u8[1024]{0}', space=vmem, size = 0x400, scoped, tag = 'output window, operand 0, single buffered']
    #allocation4 [shape = 's32[1]{0}', space=sflag, size = 0x4, scoped, tag = 'scoped memory for net_forward.1']
    %14 = vsyncpa [#allocation4], 0
    // Predicated region
    $region2: #{net_forward.1} parent=1 // pred_check
      _
    $region3: #{net_forward.1} parent=1 // pred_check_branch
      %16 = sbr.rel (0) target = $region5
    $region4: #{net_forward.1} parent=1 // pred_region
      _
    $region5: #{net_forward.1} parent=1 // pred_fallthru
      _
    // Predicated region
    $region6: #{net_forward.1} parent=1 // pred_check
      _
    $region7: #{net_forward.1} parent=1 // pred_check_branch
      %18 = sbr.rel (0) target = $region9
    $region8: #{net_forward.1} parent=1 // pred_region
      _
    $region9: #{net_forward.1} parent=1 // pred_fallthru
      _
    // Predicated region
    $region10: #{net_forward.1} parent=1 // pred_check
      _
    $region11: #{net_forward.1} parent=1 // pred_check_branch
      %20 = sbr.rel (0) target = $region13
    $region12: #{net_forward.1} parent=1 // pred_region
      _
    $region13: #{net_forward.1} parent=1 // pred_fallthru
      _
    // Predicated region
    $region14: #{net_forward.1} parent=1 // pred_check
      _
    $region15: #{net_forward.1} parent=1 // pred_check_branch
      %22 = sbr.rel (0) target = $region17
    $region16: #{net_forward.1} parent=1 // pred_region
      _
    $region17: #{net_forward.1} parent=1 // pred_fallthru
      _
    // Predicated region
    $region18: #{net_forward.1} parent=1 // pred_check
      _
    $region19: #{net_forward.1} parent=1 // pred_check_branch
      %24 = sbr.rel (0) target = $region21
    $region20: #{net_forward.1} parent=1 // pred_region
      _
    $region21: #{net_forward.1} parent=1 // pred_fallthru
      _
    // Predicated region
    $region22: #{net_forward.1} parent=1 // pred_check
      _
    $region23: #{net_forward.1} parent=1 // pred_check_branch
      %26 = sbr.rel (0) target = $region25
    $region24: #{net_forward.1} parent=1 // pred_region
      _
    $region25: #{net_forward.1} parent=1 // pred_fallthru
      _
    // Predicated region
    $region26: #{net_forward.1} parent=1 // pred_check
      _
    $region27: #{net_forward.1} parent=1 // pred_check_branch
      %28 = sbr.rel (0) target = $region29
    $region28: #{net_forward.1} parent=1 // pred_region
      _
    $region29: #{net_forward.1} parent=1 // pred_fallthru
      _
    %v30 = vld [vmem:[%s0] sm:$0xff]
    %v31 = vld [vmem:[%s0 + $0x8] sm:$0xff]
    %v32 = vld [vmem:[%s0 + $0x10] sm:$0xff]
    %v33 = vld [vmem:[%s0 + $0x18] sm:$0xff]
    %v34 = vld [vmem:[%s0 + $0x20] sm:$0xff]
    %v35 = vld [vmem:[%s0 + $0x28] sm:$0xff]
    %v36 = vld [vmem:[%s0 + $0x30] sm:$0xff]
    %v37 = vld [vmem:[%s0 + $0x38] sm:$0xff]
    %v38 = vld [vmem:[%s0 + $0x40] sm:$0xff]
    %v39 = vld [vmem:[%s0 + $0x48] sm:$0xff]
    %v40 = vld [vmem:[%s0 + $0x50] sm:$0xff]
    %v41 = vld [vmem:[%s0 + $0x58] sm:$0xff]
    %v42 = vld [vmem:[%s0 + $0x60] sm:$0xff]
    %v43 = vld [vmem:[%s0 + $0x68] sm:$0xff]
    %v44 = vld [vmem:[%s0 + $0x70] sm:$0xff]
    %v45 = vld [vmem:[%s0 + $0x78] sm:$0xff]
    %v46 = vld [vmem:[%s0 + $0x80] sm:$0xff]
    %v47 = vld [vmem:[%s0 + $0x88] sm:$0xff]
    %v48 = vld [vmem:[%s0 + $0x90] sm:$0xff]
    %v49 = vld [vmem:[%s0 + $0x98] sm:$0xff]
    %v50 = vld [vmem:[%s0 + $0xa0] sm:$0xff]
    %v51 = vld [vmem:[%s0 + $0xa8] sm:$0xff]
    %v52 = vld [vmem:[%s0 + $0xb0] sm:$0xff]
    %v53 = vld [vmem:[%s0 + $0xb8] sm:$0xff]
    %v54 = vld [vmem:[%s0 + $0xc0] sm:$0xff]
    %v55 = vld [vmem:[%s0 + $0xc8] sm:$0xff]
    %v56 = vld [vmem:[%s0 + $0xd0] sm:$0xff]
    %v57 = vld [vmem:[%s0 + $0xd8] sm:$0xff]
    %v58 = vld [vmem:[%s0 + $0xe0] sm:$0xff]
    %v59 = vld [vmem:[%s0 + $0xe8] sm:$0xff]
    %v60 = vld [vmem:[%s0 + $0xf0] sm:$0xff]
    %v61 = vld [vmem:[%s0 + $0xf8] sm:$0xff]
    %v62 = vpack.c.bf16 %v31, %v30
    %v63 = vpack.c.bf16 %v33, %v32
    %v64 = vpack.c.bf16 %v35, %v34
    %v65 = vpack.c.bf16 %v37, %v36
    %v66 = vpack.c.bf16 %v39, %v38
    %v67 = vpack.c.bf16 %v41, %v40
    %v68 = vpack.c.bf16 %v43, %v42
    %v69 = vpack.c.bf16 %v45, %v44
    %v70 = vpack.c.bf16 %v47, %v46
    %v71 = vpack.c.bf16 %v49, %v48
    %v72 = vpack.c.bf16 %v51, %v50
    %v73 = vpack.c.bf16 %v53, %v52
    %v74 = vpack.c.bf16 %v55, %v54
    %v75 = vpack.c.bf16 %v57, %v56
    %v76 = vpack.c.bf16 %v59, %v58
    %v77 = vpack.c.bf16 %v61, %v60
    %v78 = vld [vmem:[%s1] sm:$0xff]
    %v79 = vld [vmem:[%s1 + $0x8] sm:$0xff]
    %v80 = vld [vmem:[%s1 + $0x10] sm:$0xff]
    %v81 = vld [vmem:[%s1 + $0x18] sm:$0xff]
    %v82 = vld [vmem:[%s2] sm:$0x3]
    %v84 = vlaneseq
    %v85 = vshrl.u32 %v84, 7
    %v86 = vsub.s32 0, %v85
    %v87 = vrot.slane %v82, %v86
    %v88 = vlaneseq
    %v89 = vshrl.u32 %v88, 7
    %v90 = vsub.s32 1, %v89
    %v91 = vrot.slane %v82, %v90
    %v98 = vunpack.c.l.b16 %v78
    %v99 = vunpack.c.h.b16 %v78
    %v100 = vunpack.c.l.b16 %v79
    %v101 = vunpack.c.h.b16 %v79
    %v102 = vunpack.c.l.b16 %v80
    %v103 = vunpack.c.h.b16 %v80
    %v104 = vunpack.c.l.b16 %v81
    %v105 = vunpack.c.h.b16 %v81
    %v106 = vpack.c.b16 %v100, %v98
    %v107 = vpack.c.b16 %v101, %v99
    %v108 = vpack.c.b16 %v104, %v102
    %v109 = vpack.c.b16 %v105, %v103
    %vm114 = vcmask 261120
    %v116 = vsel %vm114, %v62, 0
    %v119 = vsel %vm114, %v63, 0
    %v122 = vsel %vm114, %v64, 0
    %v125 = vsel %vm114, %v65, 0
    %v128 = vsel %vm114, %v66, 0
    %v131 = vsel %vm114, %v67, 0
    %v134 = vsel %vm114, %v68, 0
    %v137 = vsel %vm114, %v69, 0
    %v140 = vsel %vm114, %v70, 0
    %v143 = vsel %vm114, %v71, 0
    %v146 = vsel %vm114, %v72, 0
    %v149 = vsel %vm114, %v73, 0
    %v152 = vsel %vm114, %v74, 0
    %v155 = vsel %vm114, %v75, 0
    %v158 = vsel %vm114, %v76, 0
    %v161 = vsel %vm114, %v77, 0
    %163 = vmatprep.subr.bf16.mxu0 0
    %164 = vmatpush1.bf16.msra.mxu0 0
    %165 = vmatprep.subr.bf16.mxu0 0
    %166 = vmatpush1.bf16.msra.mxu0 0
    %167 = vmatprep.subr.bf16.mxu0 0
    %168 = vmatpush1.bf16.msra.mxu0 0
    %169 = vmatprep.subr.bf16.mxu0 0
    %170 = vmatpush1.bf16.msra.mxu0 0
    %171 = vmatprep.subr.bf16.mxu0 0
    %172 = vmatpush1.bf16.msra.mxu0 0
    %173 = vmatprep.subr.bf16.mxu0 0
    %174 = vmatpush1.bf16.msra.mxu0 0
    %175 = vmatprep.subr.bf16.mxu0 %v109
    %176 = vmatpush1.bf16.msra.mxu0 %v108
    %177 = vmatprep.subr.bf16.mxu0 %v107
    %178 = vmatpush1.bf16.msra.mxu0 %v106
    %179 = vmatprep.subr.bf16.mxu0 0
    %180 = vmatpush2.bf16.msra.mxu0 0
    %181 = vmatprep.subr.bf16.mxu0 0
    %182 = vmatpush2.bf16.msra.mxu0 0
    %183 = vmatprep.subr.bf16.mxu0 0
    %184 = vmatpush2.bf16.msra.mxu0 0
    %185 = vmatprep.subr.bf16.mxu0 0
    %186 = vmatpush2.bf16.msra.mxu0 0
    %187 = vmatprep.subr.bf16.mxu0 0
    %188 = vmatpush2.bf16.msra.mxu0 0
    %189 = vmatprep.subr.bf16.mxu0 0
    %190 = vmatpush2.bf16.msra.mxu0 0
    %191 = vmatprep.subr.bf16.mxu0 0
    %192 = vmatpush2.bf16.msra.mxu0 0
    %193 = vmatprep.subr.bf16.mxu0 0
    %194 = vmatpush2.bf16.msra.mxu0 0
    %195 = vmatprep.mubr.bf16.mxu0 0
    %196 = vmatmul.mubr.bf16.gmra.mxu0 %v116
    %v197 = vpop.f32.mrf.mxu0
    %v198 = vadd.f32 %v87, %v197
    %v199 = vpop.f32.mrf.mxu0
    %v200 = vadd.f32 %v91, %v199
    %v201 = vpop.f32.mrf.mxu0
    %v202 = vadd.f32 %v87, %v201
    %v203 = vpop.f32.mrf.mxu0
    %v204 = vadd.f32 %v91, %v203
    %205 = vmatprep.mubr.bf16.mxu0 0
    %206 = vmatmul.mubr.bf16.gmra.mxu0 %v119
    %v207 = vpop.f32.mrf.mxu0
    %v208 = vadd.f32 %v87, %v207
    %v209 = vpop.f32.mrf.mxu0
    %v210 = vadd.f32 %v91, %v209
    %v211 = vpop.f32.mrf.mxu0
    %v212 = vadd.f32 %v87, %v211
    %v213 = vpop.f32.mrf.mxu0
    %v214 = vadd.f32 %v91, %v213
    %215 = vmatprep.mubr.bf16.mxu0 0
    %216 = vmatmul.mubr.bf16.gmra.mxu0 %v122
    %v217 = vpop.f32.mrf.mxu0
    %v218 = vadd.f32 %v87, %v217
    %v219 = vpop.f32.mrf.mxu0
    %v220 = vadd.f32 %v91, %v219
    %v221 = vpop.f32.mrf.mxu0
    %v222 = vadd.f32 %v87, %v221
    %v223 = vpop.f32.mrf.mxu0
    %v224 = vadd.f32 %v91, %v223
    %225 = vmatprep.mubr.bf16.mxu0 0
    %226 = vmatmul.mubr.bf16.gmra.mxu0 %v125
    %v227 = vpop.f32.mrf.mxu0
    %v228 = vadd.f32 %v87, %v227
    %v229 = vpop.f32.mrf.mxu0
    %v230 = vadd.f32 %v91, %v229
    %v231 = vpop.f32.mrf.mxu0
    %v232 = vadd.f32 %v87, %v231
    %v233 = vpop.f32.mrf.mxu0
    %v234 = vadd.f32 %v91, %v233
    %235 = vmatprep.mubr.bf16.mxu0 0
    %236 = vmatmul.mubr.bf16.gmra.mxu0 %v128
    %v237 = vpop.f32.mrf.mxu0
    %v238 = vadd.f32 %v87, %v237
    %v239 = vpop.f32.mrf.mxu0
    %v240 = vadd.f32 %v91, %v239
    %v241 = vpop.f32.mrf.mxu0
    %v242 = vadd.f32 %v87, %v241
    %v243 = vpop.f32.mrf.mxu0
    %v244 = vadd.f32 %v91, %v243
    %245 = vmatprep.mubr.bf16.mxu0 0
    %246 = vmatmul.mubr.bf16.gmra.mxu0 %v131
    %v247 = vpop.f32.mrf.mxu0
    %v248 = vadd.f32 %v87, %v247
    %v249 = vpop.f32.mrf.mxu0
    %v250 = vadd.f32 %v91, %v249
    %v251 = vpop.f32.mrf.mxu0
    %v252 = vadd.f32 %v87, %v251
    %v253 = vpop.f32.mrf.mxu0
    %v254 = vadd.f32 %v91, %v253
    %255 = vmatprep.mubr.bf16.mxu0 0
    %256 = vmatmul.mubr.bf16.gmra.mxu0 %v134
    %v257 = vpop.f32.mrf.mxu0
    %v258 = vadd.f32 %v87, %v257
    %v259 = vpop.f32.mrf.mxu0
    %v260 = vadd.f32 %v91, %v259
    %v261 = vpop.f32.mrf.mxu0
    %v262 = vadd.f32 %v87, %v261
    %v263 = vpop.f32.mrf.mxu0
    %v264 = vadd.f32 %v91, %v263
    %265 = vmatprep.mubr.bf16.mxu0 0
    %266 = vmatmul.mubr.bf16.gmra.mxu0 %v137
    %v267 = vpop.f32.mrf.mxu0
    %v268 = vadd.f32 %v87, %v267
    %v269 = vpop.f32.mrf.mxu0
    %v270 = vadd.f32 %v91, %v269
    %v271 = vpop.f32.mrf.mxu0
    %v272 = vadd.f32 %v87, %v271
    %v273 = vpop.f32.mrf.mxu0
    %v274 = vadd.f32 %v91, %v273
    %275 = vmatprep.mubr.bf16.mxu0 0
    %276 = vmatmul.mubr.bf16.gmra.mxu0 %v140
    %v277 = vpop.f32.mrf.mxu0
    %v278 = vadd.f32 %v87, %v277
    %v279 = vpop.f32.mrf.mxu0
    %v280 = vadd.f32 %v91, %v279
    %v281 = vpop.f32.mrf.mxu0
    %v282 = vadd.f32 %v87, %v281
    %v283 = vpop.f32.mrf.mxu0
    %v284 = vadd.f32 %v91, %v283
    %285 = vmatprep.mubr.bf16.mxu0 0
    %286 = vmatmul.mubr.bf16.gmra.mxu0 %v143
    %v287 = vpop.f32.mrf.mxu0
    %v288 = vadd.f32 %v87, %v287
    %v289 = vpop.f32.mrf.mxu0
    %v290 = vadd.f32 %v91, %v289
    %v291 = vpop.f32.mrf.mxu0
    %v292 = vadd.f32 %v87, %v291
    %v293 = vpop.f32.mrf.mxu0
    %v294 = vadd.f32 %v91, %v293
    %295 = vmatprep.mubr.bf16.mxu0 0
    %296 = vmatmul.mubr.bf16.gmra.mxu0 %v146
    %v297 = vpop.f32.mrf.mxu0
    %v298 = vadd.f32 %v87, %v297
    %v299 = vpop.f32.mrf.mxu0
    %v300 = vadd.f32 %v91, %v299
    %v301 = vpop.f32.mrf.mxu0
    %v302 = vadd.f32 %v87, %v301
    %v303 = vpop.f32.mrf.mxu0
    %v304 = vadd.f32 %v91, %v303
    %305 = vmatprep.mubr.bf16.mxu0 0
    %306 = vmatmul.mubr.bf16.gmra.mxu0 %v149
    %v307 = vpop.f32.mrf.mxu0
    %v308 = vadd.f32 %v87, %v307
    %v309 = vpop.f32.mrf.mxu0
    %v310 = vadd.f32 %v91, %v309
    %v311 = vpop.f32.mrf.mxu0
    %v312 = vadd.f32 %v87, %v311
    %v313 = vpop.f32.mrf.mxu0
    %v314 = vadd.f32 %v91, %v313
    %315 = vmatprep.mubr.bf16.mxu0 0
    %316 = vmatmul.mubr.bf16.gmra.mxu0 %v152
    %v317 = vpop.f32.mrf.mxu0
    %v318 = vadd.f32 %v87, %v317
    %v319 = vpop.f32.mrf.mxu0
    %v320 = vadd.f32 %v91, %v319
    %v321 = vpop.f32.mrf.mxu0
    %v322 = vadd.f32 %v87, %v321
    %v323 = vpop.f32.mrf.mxu0
    %v324 = vadd.f32 %v91, %v323
    %325 = vmatprep.mubr.bf16.mxu0 0
    %326 = vmatmul.mubr.bf16.gmra.mxu0 %v155
    %v327 = vpop.f32.mrf.mxu0
    %v328 = vadd.f32 %v87, %v327
    %v329 = vpop.f32.mrf.mxu0
    %v330 = vadd.f32 %v91, %v329
    %v331 = vpop.f32.mrf.mxu0
    %v332 = vadd.f32 %v87, %v331
    %v333 = vpop.f32.mrf.mxu0
    %v334 = vadd.f32 %v91, %v333
    %335 = vmatprep.mubr.bf16.mxu0 0
    %336 = vmatmul.mubr.bf16.gmra.mxu0 %v158
    %v337 = vpop.f32.mrf.mxu0
    %v338 = vadd.f32 %v87, %v337
    %v339 = vpop.f32.mrf.mxu0
    %v340 = vadd.f32 %v91, %v339
    %v341 = vpop.f32.mrf.mxu0
    %v342 = vadd.f32 %v87, %v341
    %v343 = vpop.f32.mrf.mxu0
    %v344 = vadd.f32 %v91, %v343
    %345 = vmatprep.mubr.bf16.mxu0 0
    %346 = vmatmul.mubr.bf16.gmra.mxu0 %v161
    %v347 = vpop.f32.mrf.mxu0
    %v348 = vadd.f32 %v87, %v347
    %v349 = vpop.f32.mrf.mxu0
    %v350 = vadd.f32 %v91, %v349
    %v351 = vpop.f32.mrf.mxu0
    %v352 = vadd.f32 %v87, %v351
    %v353 = vpop.f32.mrf.mxu0
    %v354 = vadd.f32 %v91, %v353
    %355 = vdwg.mxu0
    %v356 = vmax.f32 %v198, 0.0
    %v357 = vmax.f32 %v200, 0.0
    %v358 = vmax.f32 %v202, 0.0
    %v359 = vmax.f32 %v204, 0.0
    %v360 = vmax.f32 %v208, 0.0
    %v361 = vmax.f32 %v210, 0.0
    %v362 = vmax.f32 %v212, 0.0
    %v363 = vmax.f32 %v214, 0.0
    %v364 = vmax.f32 %v218, 0.0
    %v365 = vmax.f32 %v220, 0.0
    %v366 = vmax.f32 %v222, 0.0
    %v367 = vmax.f32 %v224, 0.0
    %v368 = vmax.f32 %v228, 0.0
    %v369 = vmax.f32 %v230, 0.0
    %v370 = vmax.f32 %v232, 0.0
    %v371 = vmax.f32 %v234, 0.0
    %v372 = vmax.f32 %v238, 0.0
    %v373 = vmax.f32 %v240, 0.0
    %v374 = vmax.f32 %v242, 0.0
    %v375 = vmax.f32 %v244, 0.0
    %v376 = vmax.f32 %v248, 0.0
    %v377 = vmax.f32 %v250, 0.0
    %v378 = vmax.f32 %v252, 0.0
    %v379 = vmax.f32 %v254, 0.0
    %v380 = vmax.f32 %v258, 0.0
    %v381 = vmax.f32 %v260, 0.0
    %v382 = vmax.f32 %v262, 0.0
    %v383 = vmax.f32 %v264, 0.0
    %v384 = vmax.f32 %v268, 0.0
    %v385 = vmax.f32 %v270, 0.0
    %v386 = vmax.f32 %v272, 0.0
    %v387 = vmax.f32 %v274, 0.0
    %v388 = vmax.f32 %v278, 0.0
    %v389 = vmax.f32 %v280, 0.0
    %v390 = vmax.f32 %v282, 0.0
    %v391 = vmax.f32 %v284, 0.0
    %v392 = vmax.f32 %v288, 0.0
    %v393 = vmax.f32 %v290, 0.0
    %v394 = vmax.f32 %v292, 0.0
    %v395 = vmax.f32 %v294, 0.0
    %v396 = vmax.f32 %v298, 0.0
    %v397 = vmax.f32 %v300, 0.0
    %v398 = vmax.f32 %v302, 0.0
    %v399 = vmax.f32 %v304, 0.0
    %v400 = vmax.f32 %v308, 0.0
    %v401 = vmax.f32 %v310, 0.0
    %v402 = vmax.f32 %v312, 0.0
    %v403 = vmax.f32 %v314, 0.0
    %v404 = vmax.f32 %v318, 0.0
    %v405 = vmax.f32 %v320, 0.0
    %v406 = vmax.f32 %v322, 0.0
    %v407 = vmax.f32 %v324, 0.0
    %v408 = vmax.f32 %v328, 0.0
    %v409 = vmax.f32 %v330, 0.0
    %v410 = vmax.f32 %v332, 0.0
    %v411 = vmax.f32 %v334, 0.0
    %v412 = vmax.f32 %v338, 0.0
    %v413 = vmax.f32 %v340, 0.0
    %v414 = vmax.f32 %v342, 0.0
    %v415 = vmax.f32 %v344, 0.0
    %v416 = vmax.f32 %v348, 0.0
    %v417 = vmax.f32 %v350, 0.0
    %v418 = vmax.f32 %v352, 0.0
    %v419 = vmax.f32 %v354, 0.0
    %v420 = vpack.c.bf16 %v358, %v356
    %v421 = vpack.c.bf16 %v359, %v357
    %v422 = vpack.c.bf16 %v362, %v360
    %v423 = vpack.c.bf16 %v363, %v361
    %v424 = vpack.c.bf16 %v366, %v364
    %v425 = vpack.c.bf16 %v367, %v365
    %v426 = vpack.c.bf16 %v370, %v368
    %v427 = vpack.c.bf16 %v371, %v369
    %v428 = vpack.c.bf16 %v374, %v372
    %v429 = vpack.c.bf16 %v375, %v373
    %v430 = vpack.c.bf16 %v378, %v376
    %v431 = vpack.c.bf16 %v379, %v377
    %v432 = vpack.c.bf16 %v382, %v380
    %v433 = vpack.c.bf16 %v383, %v381
    %v434 = vpack.c.bf16 %v386, %v384
    %v435 = vpack.c.bf16 %v387, %v385
    %v436 = vpack.c.bf16 %v390, %v388
    %v437 = vpack.c.bf16 %v391, %v389
    %v438 = vpack.c.bf16 %v394, %v392
    %v439 = vpack.c.bf16 %v395, %v393
    %v440 = vpack.c.bf16 %v398, %v396
    %v441 = vpack.c.bf16 %v399, %v397
    %v442 = vpack.c.bf16 %v402, %v400
    %v443 = vpack.c.bf16 %v403, %v401
    %v444 = vpack.c.bf16 %v406, %v404
    %v445 = vpack.c.bf16 %v407, %v405
    %v446 = vpack.c.bf16 %v410, %v408
    %v447 = vpack.c.bf16 %v411, %v409
    %v448 = vpack.c.bf16 %v414, %v412
    %v449 = vpack.c.bf16 %v415, %v413
    %v450 = vpack.c.bf16 %v418, %v416
    %v451 = vpack.c.bf16 %v419, %v417
    %v452 = vld [vmem:[%s3] sm:$0xf]
    %v453 = vld [vmem:[%s3 + $0x4] sm:$0xf]
    %v454 = vld [vmem:[%s3 + $0x8] sm:$0xf]
    %v455 = vld [vmem:[%s3 + $0xc] sm:$0xf]
    %v456 = vld [vmem:[%s3 + $0x10] sm:$0xf]
    %v457 = vld [vmem:[%s3 + $0x14] sm:$0xf]
    %v458 = vld [vmem:[%s3 + $0x18] sm:$0xf]
    %v459 = vld [vmem:[%s3 + $0x1c] sm:$0xf]
    %v460 = vld [vmem:[%s3 + $0x20] sm:$0xf]
    %v461 = vld [vmem:[%s3 + $0x24] sm:$0xf]
    %v462 = vld [vmem:[%s3 + $0x28] sm:$0xf]
    %v463 = vld [vmem:[%s3 + $0x2c] sm:$0xf]
    %v464 = vld [vmem:[%s3 + $0x30] sm:$0xf]
    %v465 = vld [vmem:[%s3 + $0x34] sm:$0xf]
    %v466 = vld [vmem:[%s3 + $0x38] sm:$0xf]
    %v467 = vld [vmem:[%s3 + $0x3c] sm:$0xf]
    %v468 = vld [vmem:[%s3 + $0x40] sm:$0xf]
    %v469 = vld [vmem:[%s3 + $0x44] sm:$0xf]
    %v470 = vld [vmem:[%s3 + $0x48] sm:$0xf]
    %v471 = vld [vmem:[%s3 + $0x4c] sm:$0xf]
    %v472 = vld [vmem:[%s3 + $0x50] sm:$0xf]
    %v473 = vld [vmem:[%s3 + $0x54] sm:$0xf]
    %v474 = vld [vmem:[%s3 + $0x58] sm:$0xf]
    %v475 = vld [vmem:[%s3 + $0x5c] sm:$0xf]
    %v476 = vld [vmem:[%s3 + $0x60] sm:$0xf]
    %v477 = vld [vmem:[%s3 + $0x64] sm:$0xf]
    %v478 = vld [vmem:[%s3 + $0x68] sm:$0xf]
    %v479 = vld [vmem:[%s3 + $0x6c] sm:$0xf]
    %v480 = vld [vmem:[%s3 + $0x70] sm:$0xf]
    %v481 = vld [vmem:[%s3 + $0x74] sm:$0xf]
    %v482 = vld [vmem:[%s3 + $0x78] sm:$0xf]
    %v483 = vld [vmem:[%s3 + $0x7c] sm:$0xf]
    %v484 = vld [vmem:[%s4] sm:$0x1]
    %v486 = vlaneseq
    %v487 = vshrl.u32 %v486, 7
    %v488 = vsub.s32 0, %v487
    %v489 = vrot.slane %v484, %v488
    %v523 = vunpack.c.l.b16 %v452
    %v524 = vunpack.c.l.b16 %v453
    %v525 = vunpack.c.l.b16 %v454
    %v526 = vunpack.c.l.b16 %v455
    %v527 = vunpack.c.l.b16 %v456
    %v528 = vunpack.c.l.b16 %v457
    %v529 = vunpack.c.l.b16 %v458
    %v530 = vunpack.c.l.b16 %v459
    %v531 = vunpack.c.l.b16 %v460
    %v532 = vunpack.c.l.b16 %v461
    %v533 = vunpack.c.l.b16 %v462
    %v534 = vunpack.c.l.b16 %v463
    %v535 = vunpack.c.l.b16 %v464
    %v536 = vunpack.c.l.b16 %v465
    %v537 = vunpack.c.l.b16 %v466
    %v538 = vunpack.c.l.b16 %v467
    %v539 = vunpack.c.l.b16 %v468
    %v540 = vunpack.c.l.b16 %v469
    %v541 = vunpack.c.l.b16 %v470
    %v542 = vunpack.c.l.b16 %v471
    %v543 = vunpack.c.l.b16 %v472
    %v544 = vunpack.c.l.b16 %v473
    %v545 = vunpack.c.l.b16 %v474
    %v546 = vunpack.c.l.b16 %v475
    %v547 = vunpack.c.l.b16 %v476
    %v548 = vunpack.c.l.b16 %v477
    %v549 = vunpack.c.l.b16 %v478
    %v550 = vunpack.c.l.b16 %v479
    %v551 = vunpack.c.l.b16 %v480
    %v552 = vunpack.c.l.b16 %v481
    %v553 = vunpack.c.l.b16 %v482
    %v554 = vunpack.c.l.b16 %v483
    %v555 = vpack.c.b16 %v524, %v523
    %v556 = vpack.c.b16 %v526, %v525
    %v557 = vpack.c.b16 %v528, %v527
    %v558 = vpack.c.b16 %v530, %v529
    %v559 = vpack.c.b16 %v532, %v531
    %v560 = vpack.c.b16 %v534, %v533
    %v561 = vpack.c.b16 %v536, %v535
    %v562 = vpack.c.b16 %v538, %v537
    %v563 = vpack.c.b16 %v540, %v539
    %v564 = vpack.c.b16 %v542, %v541
    %v565 = vpack.c.b16 %v544, %v543
    %v566 = vpack.c.b16 %v546, %v545
    %v567 = vpack.c.b16 %v548, %v547
    %v568 = vpack.c.b16 %v550, %v549
    %v569 = vpack.c.b16 %v552, %v551
    %v570 = vpack.c.b16 %v554, %v553
    %587 = vmatprep.subr.bf16.mxu0 0
    %588 = vmatpush1.bf16.msra.mxu0 %v562
    %589 = vmatprep.subr.bf16.mxu0 0
    %590 = vmatpush1.bf16.msra.mxu0 %v561
    %591 = vmatprep.subr.bf16.mxu0 0
    %592 = vmatpush1.bf16.msra.mxu0 %v560
    %593 = vmatprep.subr.bf16.mxu0 0
    %594 = vmatpush1.bf16.msra.mxu0 %v559
    %595 = vmatprep.subr.bf16.mxu0 0
    %596 = vmatpush1.bf16.msra.mxu0 %v558
    %597 = vmatprep.subr.bf16.mxu0 0
    %598 = vmatpush1.bf16.msra.mxu0 %v557
    %599 = vmatprep.subr.bf16.mxu0 0
    %600 = vmatpush1.bf16.msra.mxu0 %v556
    %601 = vmatprep.subr.bf16.mxu0 0
    %602 = vmatpush1.bf16.msra.mxu0 %v555
    %603 = vmatprep.subr.bf16.mxu0 0
    %604 = vmatpush2.bf16.msra.mxu0 %v570
    %605 = vmatprep.subr.bf16.mxu0 0
    %606 = vmatpush2.bf16.msra.mxu0 %v569
    %607 = vmatprep.subr.bf16.mxu0 0
    %608 = vmatpush2.bf16.msra.mxu0 %v568
    %609 = vmatprep.subr.bf16.mxu0 0
    %610 = vmatpush2.bf16.msra.mxu0 %v567
    %611 = vmatprep.subr.bf16.mxu0 0
    %612 = vmatpush2.bf16.msra.mxu0 %v566
    %613 = vmatprep.subr.bf16.mxu0 0
    %614 = vmatpush2.bf16.msra.mxu0 %v565
    %615 = vmatprep.subr.bf16.mxu0 0
    %616 = vmatpush2.bf16.msra.mxu0 %v564
    %617 = vmatprep.subr.bf16.mxu0 0
    %618 = vmatpush2.bf16.msra.mxu0 %v563
    %619 = vmatprep.mubr.bf16.mxu0 %v421
    %620 = vmatmul.mubr.bf16.gmra.mxu0 %v420
    %v621 = vpop.f32.mrf.mxu0
    %v622 = vadd.f32 %v489, %v621
    %v623 = vpop.f32.mrf.mxu0
    %v624 = vpop.f32.mrf.mxu0
    %v625 = vadd.f32 %v489, %v624
    %v626 = vpop.f32.mrf.mxu0
    %627 = vmatprep.mubr.bf16.mxu0 %v423
    %628 = vmatmul.mubr.bf16.gmra.mxu0 %v422
    %v629 = vpop.f32.mrf.mxu0
    %v630 = vadd.f32 %v489, %v629
    %v631 = vpop.f32.mrf.mxu0
    %v632 = vpop.f32.mrf.mxu0
    %v633 = vadd.f32 %v489, %v632
    %v634 = vpop.f32.mrf.mxu0
    %635 = vmatprep.mubr.bf16.mxu0 %v425
    %636 = vmatmul.mubr.bf16.gmra.mxu0 %v424
    %v637 = vpop.f32.mrf.mxu0
    %v638 = vadd.f32 %v489, %v637
    %v639 = vpop.f32.mrf.mxu0
    %v640 = vpop.f32.mrf.mxu0
    %v641 = vadd.f32 %v489, %v640
    %v642 = vpop.f32.mrf.mxu0
    %643 = vmatprep.mubr.bf16.mxu0 %v427
    %644 = vmatmul.mubr.bf16.gmra.mxu0 %v426
    %v645 = vpop.f32.mrf.mxu0
    %v646 = vadd.f32 %v489, %v645
    %v647 = vpop.f32.mrf.mxu0
    %v648 = vpop.f32.mrf.mxu0
    %v649 = vadd.f32 %v489, %v648
    %v650 = vpop.f32.mrf.mxu0
    %651 = vmatprep.mubr.bf16.mxu0 %v429
    %652 = vmatmul.mubr.bf16.gmra.mxu0 %v428
    %v653 = vpop.f32.mrf.mxu0
    %v654 = vadd.f32 %v489, %v653
    %v655 = vpop.f32.mrf.mxu0
    %v656 = vpop.f32.mrf.mxu0
    %v657 = vadd.f32 %v489, %v656
    %v658 = vpop.f32.mrf.mxu0
    %659 = vmatprep.mubr.bf16.mxu0 %v431
    %660 = vmatmul.mubr.bf16.gmra.mxu0 %v430
    %v661 = vpop.f32.mrf.mxu0
    %v662 = vadd.f32 %v489, %v661
    %v663 = vpop.f32.mrf.mxu0
    %v664 = vpop.f32.mrf.mxu0
    %v665 = vadd.f32 %v489, %v664
    %v666 = vpop.f32.mrf.mxu0
    %667 = vmatprep.mubr.bf16.mxu0 %v433
    %668 = vmatmul.mubr.bf16.gmra.mxu0 %v432
    %v669 = vpop.f32.mrf.mxu0
    %v670 = vadd.f32 %v489, %v669
    %v671 = vpop.f32.mrf.mxu0
    %v672 = vpop.f32.mrf.mxu0
    %v673 = vadd.f32 %v489, %v672
    %v674 = vpop.f32.mrf.mxu0
    %675 = vmatprep.mubr.bf16.mxu0 %v435
    %676 = vmatmul.mubr.bf16.gmra.mxu0 %v434
    %v677 = vpop.f32.mrf.mxu0
    %v678 = vadd.f32 %v489, %v677
    %v679 = vpop.f32.mrf.mxu0
    %v680 = vpop.f32.mrf.mxu0
    %v681 = vadd.f32 %v489, %v680
    %v682 = vpop.f32.mrf.mxu0
    %683 = vmatprep.mubr.bf16.mxu0 %v437
    %684 = vmatmul.mubr.bf16.gmra.mxu0 %v436
    %v685 = vpop.f32.mrf.mxu0
    %v686 = vadd.f32 %v489, %v685
    %v687 = vpop.f32.mrf.mxu0
    %v688 = vpop.f32.mrf.mxu0
    %v689 = vadd.f32 %v489, %v688
    %v690 = vpop.f32.mrf.mxu0
    %691 = vmatprep.mubr.bf16.mxu0 %v439
    %692 = vmatmul.mubr.bf16.gmra.mxu0 %v438
    %v693 = vpop.f32.mrf.mxu0
    %v694 = vadd.f32 %v489, %v693
    %v695 = vpop.f32.mrf.mxu0
    %v696 = vpop.f32.mrf.mxu0
    %v697 = vadd.f32 %v489, %v696
    %v698 = vpop.f32.mrf.mxu0
    %699 = vmatprep.mubr.bf16.mxu0 %v441
    %700 = vmatmul.mubr.bf16.gmra.mxu0 %v440
    %v701 = vpop.f32.mrf.mxu0
    %v702 = vadd.f32 %v489, %v701
    %v703 = vpop.f32.mrf.mxu0
    %v704 = vpop.f32.mrf.mxu0
    %v705 = vadd.f32 %v489, %v704
    %v706 = vpop.f32.mrf.mxu0
    %707 = vmatprep.mubr.bf16.mxu0 %v443
    %708 = vmatmul.mubr.bf16.gmra.mxu0 %v442
    %v709 = vpop.f32.mrf.mxu0
    %v710 = vadd.f32 %v489, %v709
    %v711 = vpop.f32.mrf.mxu0
    %v712 = vpop.f32.mrf.mxu0
    %v713 = vadd.f32 %v489, %v712
    %v714 = vpop.f32.mrf.mxu0
    %715 = vmatprep.mubr.bf16.mxu0 %v445
    %716 = vmatmul.mubr.bf16.gmra.mxu0 %v444
    %v717 = vpop.f32.mrf.mxu0
    %v718 = vadd.f32 %v489, %v717
    %v719 = vpop.f32.mrf.mxu0
    %v720 = vpop.f32.mrf.mxu0
    %v721 = vadd.f32 %v489, %v720
    %v722 = vpop.f32.mrf.mxu0
    %723 = vmatprep.mubr.bf16.mxu0 %v447
    %724 = vmatmul.mubr.bf16.gmra.mxu0 %v446
    %v725 = vpop.f32.mrf.mxu0
    %v726 = vadd.f32 %v489, %v725
    %v727 = vpop.f32.mrf.mxu0
    %v728 = vpop.f32.mrf.mxu0
    %v729 = vadd.f32 %v489, %v728
    %v730 = vpop.f32.mrf.mxu0
    %731 = vmatprep.mubr.bf16.mxu0 %v449
    %732 = vmatmul.mubr.bf16.gmra.mxu0 %v448
    %v733 = vpop.f32.mrf.mxu0
    %v734 = vadd.f32 %v489, %v733
    %v735 = vpop.f32.mrf.mxu0
    %v736 = vpop.f32.mrf.mxu0
    %v737 = vadd.f32 %v489, %v736
    %v738 = vpop.f32.mrf.mxu0
    %739 = vmatprep.mubr.bf16.mxu0 %v451
    %740 = vmatmul.mubr.bf16.gmra.mxu0 %v450
    %v741 = vpop.f32.mrf.mxu0
    %v742 = vadd.f32 %v489, %v741
    %v743 = vpop.f32.mrf.mxu0
    %v744 = vpop.f32.mrf.mxu0
    %v745 = vadd.f32 %v489, %v744
    %v746 = vpop.f32.mrf.mxu0
    %747 = vdwg.mxu0
    %v748 = vmax.f32 %v622, 0.0
    %v749 = vmax.f32 %v625, 0.0
    %v750 = vmax.f32 %v630, 0.0
    %v751 = vmax.f32 %v633, 0.0
    %v752 = vmax.f32 %v638, 0.0
    %v753 = vmax.f32 %v641, 0.0
    %v754 = vmax.f32 %v646, 0.0
    %v755 = vmax.f32 %v649, 0.0
    %v756 = vmax.f32 %v654, 0.0
    %v757 = vmax.f32 %v657, 0.0
    %v758 = vmax.f32 %v662, 0.0
    %v759 = vmax.f32 %v665, 0.0
    %v760 = vmax.f32 %v670, 0.0
    %v761 = vmax.f32 %v673, 0.0
    %v762 = vmax.f32 %v678, 0.0
    %v763 = vmax.f32 %v681, 0.0
    %v764 = vmax.f32 %v686, 0.0
    %v765 = vmax.f32 %v689, 0.0
    %v766 = vmax.f32 %v694, 0.0
    %v767 = vmax.f32 %v697, 0.0
    %v768 = vmax.f32 %v702, 0.0
    %v769 = vmax.f32 %v705, 0.0
    %v770 = vmax.f32 %v710, 0.0
    %v771 = vmax.f32 %v713, 0.0
    %v772 = vmax.f32 %v718, 0.0
    %v773 = vmax.f32 %v721, 0.0
    %v774 = vmax.f32 %v726, 0.0
    %v775 = vmax.f32 %v729, 0.0
    %v776 = vmax.f32 %v734, 0.0
    %v777 = vmax.f32 %v737, 0.0
    %v778 = vmax.f32 %v742, 0.0
    %v779 = vmax.f32 %v745, 0.0
    %v780 = vpack.c.bf16 %v749, %v748
    %v781 = vpack.c.bf16 %v751, %v750
    %v782 = vpack.c.bf16 %v753, %v752
    %v783 = vpack.c.bf16 %v755, %v754
    %v784 = vpack.c.bf16 %v757, %v756
    %v785 = vpack.c.bf16 %v759, %v758
    %v786 = vpack.c.bf16 %v761, %v760
    %v787 = vpack.c.bf16 %v763, %v762
    %v788 = vpack.c.bf16 %v765, %v764
    %v789 = vpack.c.bf16 %v767, %v766
    %v790 = vpack.c.bf16 %v769, %v768
    %v791 = vpack.c.bf16 %v771, %v770
    %v792 = vpack.c.bf16 %v773, %v772
    %v793 = vpack.c.bf16 %v775, %v774
    %v794 = vpack.c.bf16 %v777, %v776
    %v795 = vpack.c.bf16 %v779, %v778
    %v796 = vld [vmem:[%s5] sm:$0xf]
    %v797 = vld [vmem:[%s5 + $0x4] sm:$0xf]
    %v800 = vunpack.c.l.b16 %v796
    %v801 = vunpack.c.l.b16 %v797
    %v802 = vpack.c.b16 %v801, %v800
    %vm803 = vcmask 523264
    %v805 = vsel %vm803, %v802, 0
    %v808 = vsel %vm803, %v780, 0
    %v811 = vsel %vm803, %v781, 0
    %v814 = vsel %vm803, %v782, 0
    %v817 = vsel %vm803, %v783, 0
    %v820 = vsel %vm803, %v784, 0
    %v823 = vsel %vm803, %v785, 0
    %v826 = vsel %vm803, %v786, 0
    %v829 = vsel %vm803, %v787, 0
    %v832 = vsel %vm803, %v788, 0
    %v835 = vsel %vm803, %v789, 0
    %v838 = vsel %vm803, %v790, 0
    %v841 = vsel %vm803, %v791, 0
    %v844 = vsel %vm803, %v792, 0
    %v847 = vsel %vm803, %v793, 0
    %v850 = vsel %vm803, %v794, 0
    %v853 = vsel %vm803, %v795, 0
    %855 = vmatprep.subr.bf16.mxu0 0
    %856 = vmatpush1.bf16.xpose.msra.mxu0 %v829
    %857 = vmatprep.subr.bf16.mxu0 0
    %858 = vmatpush1.bf16.xpose.msra.mxu0 %v826
    %859 = vmatprep.subr.bf16.mxu0 0
    %860 = vmatpush1.bf16.xpose.msra.mxu0 %v823
    %861 = vmatprep.subr.bf16.mxu0 0
    %862 = vmatpush1.bf16.xpose.msra.mxu0 %v820
    %863 = vmatprep.subr.bf16.mxu0 0
    %864 = vmatpush1.bf16.xpose.msra.mxu0 %v817
    %865 = vmatprep.subr.bf16.mxu0 0
    %866 = vmatpush1.bf16.xpose.msra.mxu0 %v814
    %867 = vmatprep.subr.bf16.mxu0 0
    %868 = vmatpush1.bf16.xpose.msra.mxu0 %v811
    %869 = vmatprep.subr.bf16.mxu0 0
    %870 = vmatpush1.bf16.xpose.msra.mxu0 %v808
    %871 = vmatprep.subr.bf16.mxu0 0
    %872 = vmatpush2.bf16.xpose.msra.mxu0 %v853
    %873 = vmatprep.subr.bf16.mxu0 0
    %874 = vmatpush2.bf16.xpose.msra.mxu0 %v850
    %875 = vmatprep.subr.bf16.mxu0 0
    %876 = vmatpush2.bf16.xpose.msra.mxu0 %v847
    %877 = vmatprep.subr.bf16.mxu0 0
    %878 = vmatpush2.bf16.xpose.msra.mxu0 %v844
    %879 = vmatprep.subr.bf16.mxu0 0
    %880 = vmatpush2.bf16.xpose.msra.mxu0 %v841
    %881 = vmatprep.subr.bf16.mxu0 0
    %882 = vmatpush2.bf16.xpose.msra.mxu0 %v838
    %883 = vmatprep.subr.bf16.mxu0 0
    %884 = vmatpush2.bf16.xpose.msra.mxu0 %v835
    %885 = vmatprep.subr.bf16.mxu0 0
    %886 = vmatpush2.bf16.xpose.msra.mxu0 %v832
    %887 = vmatprep.mubr.bf16.mxu0 0
    %888 = vmatmul.mubr.bf16.gmra.mxu0 %v805
    %v889 = vpop.f32.mrf.mxu0
    %v890 = vadd.f32 0.0, %v889
    %v891 = vpop.f32.mrf.mxu0
    %v892 = vadd.f32 0.0, %v891
    %v893 = vpop.f32.mrf.mxu0
    %v894 = vpop.f32.mrf.mxu0
    %895 = vdwg.mxu0
    %v896 = vld [vmem:[#allocation2] sm:$0x1]
    %898 = vset.pattern.permute.xlu0 0
    %899 = vperm.xlu0 %898, %v896
    %v900 = vpop.permute.xlu0 %899
    %v902 = vlaneseq
    %v903 = vshrl.u32 %v902, 7
    %v904 = vsub.s32 0, %v903
    %v905 = vrot.slane %v900, %v904
    %v906 = vadd.f32 %v890, %v905
    %v907 = vadd.f32 %v892, %v905
    %v908 = vxor.u32 %v906, 2147483648
    %v909 = vxor.u32 %v907, 2147483648
    %v910 = vmul.f32 %v908, 1.442695
    %v911 = vpow.pop %v910
    %v912 = vmul.f32 %v909, 1.442695
    %v913 = vpow.pop %v912
    %v914 = vadd.f32 %v911, 1.0
    %v915 = vadd.f32 %v913, 1.0
    %v916 = vrcp.pop %v914
    %v917 = vmul.f32 1.0, %v916
    %v918 = vrcp.pop %v915
    %v919 = vmul.f32 1.0, %v918
    %v922 = vcombine.low %v917, %v919
    %v924 = vunpack.c.l.s4 1966171168
    %v925 = vunpack.c.0.s8 %v924
    %v926 = vlaneseq
    %v927 = vshrl.u32 %v926, 7
    %v928 = vsub.s32 %v925, %v927
    %v929 = vrot.slane %v922, %v928
    %v931 = vunpack.c.l.s4 1966171168
    %v932 = vunpack.c.0.s8 %v931
    %v933 = vlaneseq
    %v934 = vshrl.u32 %v933, 7
    %v935 = vsub.s32 %v932, %v934
    %v936 = vrot.slane %v929, %v935
    %v938 = vlaneseq
    %vm939 = vcmp.ge.s32.totalorder %v938, 0
    %vm940 = vcmp.lt.s32.totalorder %v938, 256
    %vm941 = vmand %vm939, %vm940
    %942 = vst.msk [vmem:[#allocation3] sm:$0x3] %vm941, %v936
    // Predicated region
    $region30: #{net_forward.1} parent=1 // pred_check
      _
    $region31: #{net_forward.1} parent=1 // pred_check_branch
      %944 = sbr.rel (0) target = $region33
    $region32: #{net_forward.1} parent=1 // pred_region
      %s946 = ssub.s32 32, 32
      %947 = vsyncadd [#allocation4], %s946
      %s949 = sshll.u32 [#allocation3], 4
      %s950 = int_to_ptr.vmem [resolvable:$true] %s949
      %952 = dma.vmem_to_hbm [thread:$0]  %s950, 32, %s7, [#allocation4]
    $region33: #{net_forward.1} parent=1 // pred_fallthru
      _
    // Predicated region
    $region34: #{net_forward.1} parent=1 // pred_check
      _
    $region35: #{net_forward.1} parent=1 // pred_check_branch
      %954 = sbr.rel (0) target = $region37
    $region36: #{net_forward.1} parent=1 // pred_region
      %955 = dma.done [#allocation4], 32
    $region37: #{net_forward.1} parent=1 // pred_fallthru
      _
    %956 = vsyncpa [#allocation4], 1

</llo_original>
